<compile_context>
chip_gen: v6e
topology: v6e:2x2x1
jax: 0.10.0
libtpu: 0.0.40
codegen_flags: <defaults>
</compile_context>

<pallas_src>
import jax
import jax.numpy as jnp
from jax.experimental import pallas as pl
from jax.experimental.pallas import tpu as pltpu

INPUT_NEURONS = 198
HIDDEN_NEURONS = 50
OUTPUT_NEURONS = 1
HIDDEN_PAD = 128            # lane width
BM_MAX = 2048               # batch tile cap (review: 256 was step-overhead bound)
MIN_SPLIT_ROWS = 256        # only split the grid when each tile still gets >= this many rows


def _round_up(x, m):
    return ((x + m - 1) // m) * m


def _cdiv(a, b):
    return -(-a // b)


def _choose_batch_tiling(B):
    """Pick (bm, b_pad): big balanced tiles, >=2 grid steps for large B (v7x 2 TCs)."""
    n_tiles = _cdiv(B, BM_MAX)
    if n_tiles < 2 and B >= 2 * MIN_SPLIT_ROWS:
        n_tiles = 2                      # feed both v7x TensorCores
    bm = _round_up(_cdiv(B, n_tiles), 8)
    return bm, bm * n_tiles


def _sigmoid_eup(z):
    # sigmoid(z) == 0.5 * (tanh(z/2) + 1): one EUP op, no divide on the VALU path.
    return 0.5 * (jnp.tanh(0.5 * z) + 1.0)


def _mlp_kernel(x_ref, w1_ref, b1_ref, w2_ref, b2_ref, w3_ref, o_ref):
    """Whole 3-layer MLP for one batch tile; weights resident in VMEM."""
    x = x_ref[...]                                                    # (bm, 198)

    # Layer 1: Linear(198 -> 128-padded) + Sigmoid  (pad lanes -> sigmoid(0)=0.5)
    h1 = jnp.dot(x, w1_ref[...], preferred_element_type=jnp.float32) + b1_ref[...]
    h1 = _sigmoid_eup(h1)                                             # (bm, 128)

    # Layer 2: Linear(128-padded -> 128-padded) + Sigmoid
    # (padded *rows* of w2 are zero, so the 0.5 pad lanes contribute nothing)
    h2 = jnp.dot(h1, w2_ref[...], preferred_element_type=jnp.float32) + b2_ref[...]
    h2 = _sigmoid_eup(h2)                                             # (bm, 128)

    # Layer 3: Linear(50 -> 1) as VPU mul + XLU lane reduction (w3 row is
    # zero-padded past column 50), avoiding an N=1 MXU pass.  b3 added in wrapper.
    out = jnp.sum(h2 * w3_ref[...], axis=-1, keepdims=True)
    o_ref[...] = out.astype(o_ref.dtype)                              # (bm, 1)
    # TODO(synk): for B in the hundreds of thousands, emit a lane-dense output
    # slab instead of the 1-wide column to avoid masked vst per 8 rows.


@jax.jit
def net_forward(x, params):
    """x: (B, 198) float32.  params: padded kernel-layout params (see prepare_params)."""
    B = x.shape[0]
    bm, b_pad = _choose_batch_tiling(B)
    if b_pad != B:
        x = jnp.pad(x, ((0, b_pad - B), (0, 0)))

    w1, b1 = params["w1"], params["b1"]
    w2, b2 = params["w2"], params["b2"]
    w3 = params["w3"]

    grid = (b_pad // bm,)
    out = pl.pallas_call(
        _mlp_kernel,
        out_shape=jax.ShapeDtypeStruct((b_pad, OUTPUT_NEURONS), jnp.float32),
        grid_spec=pltpu.PrefetchScalarGridSpec(
            num_scalar_prefetch=0,
            grid=grid,
            in_specs=[
                pl.BlockSpec((bm, INPUT_NEURONS), lambda i: (i, 0)),           # x
                pl.BlockSpec((INPUT_NEURONS, HIDDEN_PAD), lambda i: (0, 0)),   # w1
                pl.BlockSpec((1, HIDDEN_PAD), lambda i: (0, 0)),               # b1
                pl.BlockSpec((HIDDEN_PAD, HIDDEN_PAD), lambda i: (0, 0)),      # w2
                pl.BlockSpec((1, HIDDEN_PAD), lambda i: (0, 0)),               # b2
                pl.BlockSpec((1, HIDDEN_PAD), lambda i: (0, 0)),               # w3 row
            ],
            out_specs=pl.BlockSpec((bm, OUTPUT_NEURONS), lambda i: (i, 0)),
        ),
        compiler_params=pltpu.CompilerParams(
            dimension_semantics=("parallel",)),
    )(x, w1, b1, w2, b2, w3)

    # b3 is a single scalar: one broadcast add in XLA is cheaper than a (1,1)
    # masked VMEM load every grid step.
    return out[:B] + params["b3"]


def init_raw_params(key):
    """Unpadded params, (in, out) layout (= PyTorch W.T), biases (1, out)."""
    k1, k2, k3 = jax.random.split(key, 3)
    scale = 0.1
    return {
        "w1": scale * jax.random.normal(k1, (INPUT_NEURONS, HIDDEN_NEURONS), jnp.float32),
        "b1": jnp.zeros((1, HIDDEN_NEURONS), jnp.float32),
        "w2": scale * jax.random.normal(k2, (HIDDEN_NEURONS, HIDDEN_NEURONS), jnp.float32),
        "b2": jnp.zeros((1, HIDDEN_NEURONS), jnp.float32),
        "w3": scale * jax.random.normal(k3, (HIDDEN_NEURONS, OUTPUT_NEURONS), jnp.float32),
        "b3": jnp.zeros((1, OUTPUT_NEURONS), jnp.float32),
    }


def prepare_params(raw):
    """Zero-pad the hidden dimension to 128 lanes for the kernel.

    Zero-fill guarantees correctness: pad lanes carry sigmoid(0)=0.5, but the
    padded input rows of w2 and padded columns of the w3 row are zero, so they
    contribute nothing to real outputs.
    """
    pad_h = HIDDEN_PAD - HIDDEN_NEURONS
    w1 = jnp.pad(raw["w1"], ((0, 0), (0, pad_h)))                     # (198, 128)
    b1 = jnp.pad(raw["b1"], ((0, 0), (0, pad_h)))                     # (1, 128)
    w2 = jnp.pad(raw["w2"], ((0, pad_h), (0, pad_h)))                 # (128, 128)
    b2 = jnp.pad(raw["b2"], ((0, 0), (0, pad_h)))                     # (1, 128)
    w3_row = jnp.pad(raw["w3"].reshape(1, HIDDEN_NEURONS), ((0, 0), (0, pad_h)))  # (1, 128)
    b3 = raw["b3"]                                                    # (1, 1)
    return {"w1": w1, "b1": b1, "w2": w2, "b2": b2, "w3": w3_row, "b3": b3}


def _reference_forward(x, raw):
    """Pure-JAX reference identical to the PyTorch forward (unpadded params)."""
    h1 = jax.nn.sigmoid(x @ raw["w1"] + raw["b1"])
    h2 = jax.nn.sigmoid(h1 @ raw["w2"] + raw["b2"])
    return h2 @ raw["w3"] + raw["b3"]


if __name__ == "__main__":
    key = jax.random.PRNGKey(0)
    kx, kx2, kp = jax.random.split(key, 3)

    raw = init_raw_params(kp)
    params = prepare_params(raw)

    # Small batch of vectorized boards; each row is a 198-float board encoding.
    B = 8
    x = jax.random.uniform(kx, (B, INPUT_NEURONS), jnp.float32)
    out = jax.block_until_ready(net_forward(x, params))
    ref = _reference_forward(x, raw)
    assert out.shape == (B, OUTPUT_NEURONS), out.shape
    assert jnp.allclose(out, ref, atol=1e-5, rtol=1e-5), (out, ref)

    # Second shape exercises the multi-tile / balanced-bm path (grid of 2).
    B2 = 600
    x2 = jax.random.uniform(kx2, (B2, INPUT_NEURONS), jnp.float32)
    out2 = jax.block_until_ready(net_forward(x2, params))
    ref2 = _reference_forward(x2, raw)
    assert out2.shape == (B2, OUTPUT_NEURONS), out2.shape
    assert jnp.allclose(out2, ref2, atol=1e-5, rtol=1e-5), (out2, ref2)

    print("KERNEL_OK")
</pallas_src>

<mosaic_0001>
module attributes {stable_mosaic.version = 11 : i64} {
  func.func @_mlp_kernel(%arg0: i32, %arg1: memref<8x198xf32, #tpu.memory_space<vmem>>, %arg2: memref<198x128xf32, #tpu.memory_space<vmem>>, %arg3: memref<1x128xf32, #tpu.memory_space<vmem>>, %arg4: memref<128x128xf32, #tpu.memory_space<vmem>>, %arg5: memref<1x128xf32, #tpu.memory_space<vmem>>, %arg6: memref<1x128xf32, #tpu.memory_space<vmem>>, %arg7: memref<8x1xf32, #tpu.memory_space<vmem>>) attributes {dimension_semantics = [#tpu.dimension_semantics<parallel>], iteration_bounds = array<i64: 1>, scalar_prefetch = 0 : i64, scratch_operands = 0 : i64, tpu.core_type = #tpu.core_type<tc>, window_params = [{transform_indices = @transform_0, window_bounds = array<i64: 8, 198>}, {pipeline_mode = #tpu.pipeline_mode<synchronous>, transform_indices = @transform_1, window_bounds = array<i64: 198, 128>}, {pipeline_mode = #tpu.pipeline_mode<synchronous>, transform_indices = @transform_2, window_bounds = array<i64: 1, 128>}, {pipeline_mode = #tpu.pipeline_mode<synchronous>, transform_indices = @transform_3, window_bounds = array<i64: 128, 128>}, {pipeline_mode = #tpu.pipeline_mode<synchronous>, transform_indices = @transform_4, window_bounds = array<i64: 1, 128>}, {pipeline_mode = #tpu.pipeline_mode<synchronous>, transform_indices = @transform_5, window_bounds = array<i64: 1, 128>}, {transform_indices = @transform_6, window_bounds = array<i64: 8, 1>}]} {
    %c0 = arith.constant 0 : index
    %c0_0 = arith.constant 0 : index
    %0 = vector.load %arg1[%c0, %c0_0] : memref<8x198xf32, #tpu.memory_space<vmem>>, vector<8x198xf32>
    %c0_1 = arith.constant 0 : index
    %c0_2 = arith.constant 0 : index
    %1 = vector.load %arg2[%c0_1, %c0_2] : memref<198x128xf32, #tpu.memory_space<vmem>>, vector<198x128xf32>
    %cst = arith.constant dense<0.000000e+00> : vector<8x128xf32>
    %2 = tpu.matmul %0, %1, %cst {dimension_numbers = #tpu.dot_dimension_numbers<[1], [0], [0], [1], [0, 0, 1, 1], [], []>} : vector<8x198xf32>, vector<198x128xf32>, vector<8x128xf32> -> vector<8x128xf32>
    %c0_3 = arith.constant 0 : index
    %c0_4 = arith.constant 0 : index
    %3 = vector.load %arg3[%c0_3, %c0_4] : memref<1x128xf32, #tpu.memory_space<vmem>>, vector<1x128xf32>
    %4 = vector.broadcast %3 : vector<1x128xf32> to vector<8x128xf32>
    %5 = arith.addf %2, %4 : vector<8x128xf32>
    %cst_5 = arith.constant 5.000000e-01 : f32
    %6 = vector.broadcast %cst_5 : f32 to vector<8x128xf32>
    %7 = arith.mulf %6, %5 : vector<8x128xf32>
    %8 = math.tanh %7 : vector<8x128xf32>
    %cst_6 = arith.constant 1.000000e+00 : f32
    %9 = vector.broadcast %cst_6 : f32 to vector<8x128xf32>
    %10 = arith.addf %8, %9 : vector<8x128xf32>
    %cst_7 = arith.constant 5.000000e-01 : f32
    %11 = vector.broadcast %cst_7 : f32 to vector<8x128xf32>
    %12 = arith.mulf %11, %10 : vector<8x128xf32>
    %c0_8 = arith.constant 0 : index
    %c0_9 = arith.constant 0 : index
    %13 = vector.load %arg4[%c0_8, %c0_9] : memref<128x128xf32, #tpu.memory_space<vmem>>, vector<128x128xf32>
    %cst_10 = arith.constant dense<0.000000e+00> : vector<8x128xf32>
    %14 = tpu.matmul %12, %13, %cst_10 {dimension_numbers = #tpu.dot_dimension_numbers<[1], [0], [0], [1], [0, 0, 1, 1], [], []>} : vector<8x128xf32>, vector<128x128xf32>, vector<8x128xf32> -> vector<8x128xf32>
    %c0_11 = arith.constant 0 : index
    %c0_12 = arith.constant 0 : index
    %15 = vector.load %arg5[%c0_11, %c0_12] : memref<1x128xf32, #tpu.memory_space<vmem>>, vector<1x128xf32>
    %16 = vector.broadcast %15 : vector<1x128xf32> to vector<8x128xf32>
    %17 = arith.addf %14, %16 : vector<8x128xf32>
    %cst_13 = arith.constant 5.000000e-01 : f32
    %18 = vector.broadcast %cst_13 : f32 to vector<8x128xf32>
    %19 = arith.mulf %18, %17 : vector<8x128xf32>
    %20 = math.tanh %19 : vector<8x128xf32>
    %cst_14 = arith.constant 1.000000e+00 : f32
    %21 = vector.broadcast %cst_14 : f32 to vector<8x128xf32>
    %22 = arith.addf %20, %21 : vector<8x128xf32>
    %cst_15 = arith.constant 5.000000e-01 : f32
    %23 = vector.broadcast %cst_15 : f32 to vector<8x128xf32>
    %24 = arith.mulf %23, %22 : vector<8x128xf32>
    %c0_16 = arith.constant 0 : index
    %c0_17 = arith.constant 0 : index
    %25 = vector.load %arg6[%c0_16, %c0_17] : memref<1x128xf32, #tpu.memory_space<vmem>>, vector<1x128xf32>
    %26 = vector.broadcast %25 : vector<1x128xf32> to vector<8x128xf32>
    %27 = arith.mulf %24, %26 : vector<8x128xf32>
    %cst_18 = arith.constant dense<0.000000e+00> : vector<8xf32>
    %28 = vector.multi_reduction <add>, %27, %cst_18 [1] : vector<8x128xf32> to vector<8xf32>
    %29 = vector.shape_cast %28 : vector<8xf32> to vector<8x1xf32>
    %c0_19 = arith.constant 0 : index
    %c0_20 = arith.constant 0 : index
    %30 = vector.load %arg7[%c0_19, %c0_20] : memref<8x1xf32, #tpu.memory_space<vmem>>, vector<8x1xf32>
    tpu.vector_store %arg7[%c0_19, %c0_20], %29 {strides = array<i32>} : memref<8x1xf32, #tpu.memory_space<vmem>>, vector<8x1xf32>,
    return
  }
  func.func @transform_0(%arg0: i32) -> (i32, i32) {
    %c0_i32 = arith.constant 0 : i32
    %c0_i32_0 = arith.constant 0 : i32
    return %arg0, %c0_i32 : i32, i32
  }
  func.func @transform_1(%arg0: i32) -> (i32, i32) {
    %c0_i32 = arith.constant 0 : i32
    %c0_i32_0 = arith.constant 0 : i32
    %c0_i32_1 = arith.constant 0 : i32
    return %c0_i32, %c0_i32_0 : i32, i32
  }
  func.func @transform_2(%arg0: i32) -> (i32, i32) {
    %c0_i32 = arith.constant 0 : i32
    %c0_i32_0 = arith.constant 0 : i32
    %c0_i32_1 = arith.constant 0 : i32
    return %c0_i32, %c0_i32_0 : i32, i32
  }
  func.func @transform_3(%arg0: i32) -> (i32, i32) {
    %c0_i32 = arith.constant 0 : i32
    %c0_i32_0 = arith.constant 0 : i32
    %c0_i32_1 = arith.constant 0 : i32
    return %c0_i32, %c0_i32_0 : i32, i32
  }
  func.func @transform_4(%arg0: i32) -> (i32, i32) {
    %c0_i32 = arith.constant 0 : i32
    %c0_i32_0 = arith.constant 0 : i32
    %c0_i32_1 = arith.constant 0 : i32
    return %c0_i32, %c0_i32_0 : i32, i32
  }
  func.func @transform_5(%arg0: i32) -> (i32, i32) {
    %c0_i32 = arith.constant 0 : i32
    %c0_i32_0 = arith.constant 0 : i32
    %c0_i32_1 = arith.constant 0 : i32
    return %c0_i32, %c0_i32_0 : i32, i32
  }
  func.func @transform_6(%arg0: i32) -> (i32, i32) {
    %c0_i32 = arith.constant 0 : i32
    %c0_i32_0 = arith.constant 0 : i32
    return %arg0, %c0_i32 : i32, i32
  }
}

</mosaic_0001>

<llo_original>
// kernel: net_forward.1
$region0: #{net_forward.1}
  #allocation0 [shape = 'u32[]', space=smem, size = 0x4, offset = 0x4, fixed_abs, tag = 'smem constant byte address 0x4 - core index']
  #allocation1 [shape = 'u32[144,128]{1,0:T(1,128)}', space=vmem, size = 0x12000, scoped, tag = 'internal scratch']
  %s0 = inlined_call_operand.hbm [shape: f32[8,198], index: 0, kind: input, shape index: {}]
  %s1 = inlined_call_operand.hbm [shape: f32[198,128], index: 1, kind: input, shape index: {}]
  %s2 = inlined_call_operand.vmem [shape: f32[1,128], index: 2, kind: input, shape index: {}]
  %s3 = inlined_call_operand.hbm [shape: f32[128,128], index: 3, kind: input, shape index: {}]
  %s4 = inlined_call_operand.vmem [shape: f32[1,128], index: 4, kind: input, shape index: {}]
  %s5 = inlined_call_operand.vmem [shape: f32[1,128], index: 5, kind: input, shape index: {}]
  %s6 = inlined_call_operand.vmem [shape: f32[8,1], index: 6, kind: output, shape index: {}]
  %s7 = sld [smem:[#allocation0]]
  $region46: #{net_forward.1} parent=0
    _
  %s9 = ssub.s32 1, %s7
  %s10 = scalar_select 0, %s9, %s7
  $region1: #{net_forward.1} parent=0
    #allocation2 [shape = 'u8[8192]{0}', space=vmem, size = 0x2000, scoped, tag = 'input window, operand 0, single buffered']
    #allocation3 [shape = 's32[1]{0}', space=sflag, size = 0x4, scoped, tag = 'scoped memory for net_forward.1']
    #allocation4 [shape = 'u8[102400]{0}', space=vmem, size = 0x19000, scoped, tag = 'input window, operand 1, single buffered']
    #allocation5 [shape = 's32[1]{0}', space=sflag, size = 0x4, scoped, tag = 'scoped memory for net_forward.1']
    #allocation6 [shape = 'u8[65536]{0}', space=vmem, size = 0x10000, scoped, tag = 'input window, operand 3, single buffered']
    %11 = vsyncpa [#allocation3], 0
    %12 = vsyncpa [#allocation5], 0
    // Predicated region
    $region2: #{net_forward.1} parent=1 // pred_check
      _
    $region3: #{net_forward.1} parent=1 // pred_check_branch
      %14 = sbr.rel (0) target = $region5
    $region4: #{net_forward.1} parent=1 // pred_region
      %s16 = ssub.s32 256, 256
      %17 = vsyncadd [#allocation3], %s16
      %s19 = sshll.u32 [#allocation2], 4
      %s20 = int_to_ptr.vmem [resolvable:$true] %s19
      %22 = dma.hbm_to_vmem [thread:$0]  %s0, 256, %s20, [#allocation3]
    $region5: #{net_forward.1} parent=1 // pred_fallthru
      _
    // Predicated region
    $region6: #{net_forward.1} parent=1 // pred_check
      _
    $region7: #{net_forward.1} parent=1 // pred_check_branch
      %24 = sbr.rel (0) target = $region9
    $region8: #{net_forward.1} parent=1 // pred_region
      %s26 = ssub.s32 3200, 3200
      %27 = vsyncadd [#allocation5], %s26
      %s28 = sshll.u32 [#allocation4], 4
      %s29 = int_to_ptr.vmem [resolvable:$true] %s28
      %34 = dma.hbm_to_vmem [thread:$0]  %s1, 3200, %s29, [#allocation5], 128, 128, 8
    $region9: #{net_forward.1} parent=1 // pred_fallthru
      _
    // Predicated region
    $region10: #{net_forward.1} parent=1 // pred_check
      _
    $region11: #{net_forward.1} parent=1 // pred_check_branch
      %36 = sbr.rel (0) target = $region13
    $region12: #{net_forward.1} parent=1 // pred_region
      _
    $region13: #{net_forward.1} parent=1 // pred_fallthru
      _
    // Predicated region
    $region14: #{net_forward.1} parent=1 // pred_check
      _
    $region15: #{net_forward.1} parent=1 // pred_check_branch
      %38 = sbr.rel (0) target = $region17
    $region16: #{net_forward.1} parent=1 // pred_region
      %s40 = ssub.s32 2048, 2048
      %41 = vsyncadd [#allocation5], %s40
      %s42 = sshll.u32 [#allocation6], 4
      %s43 = int_to_ptr.vmem [resolvable:$true] %s42
      %48 = dma.hbm_to_vmem [thread:$0]  %s3, 2048, %s43, [#allocation5], 128, 128, 8
    $region17: #{net_forward.1} parent=1 // pred_fallthru
      _
    // Predicated region
    $region18: #{net_forward.1} parent=1 // pred_check
      _
    $region19: #{net_forward.1} parent=1 // pred_check_branch
      %50 = sbr.rel (0) target = $region21
    $region20: #{net_forward.1} parent=1 // pred_region
      _
    $region21: #{net_forward.1} parent=1 // pred_fallthru
      _
    // Predicated region
    $region22: #{net_forward.1} parent=1 // pred_check
      _
    $region23: #{net_forward.1} parent=1 // pred_check_branch
      %52 = sbr.rel (0) target = $region25
    $region24: #{net_forward.1} parent=1 // pred_region
      _
    $region25: #{net_forward.1} parent=1 // pred_fallthru
      _
    // Predicated region
    $region26: #{net_forward.1} parent=1 // pred_check
      _
    $region27: #{net_forward.1} parent=1 // pred_check_branch
      %54 = sbr.rel (0) target = $region29
    $region28: #{net_forward.1} parent=1 // pred_region
      %55 = dma.done [#allocation3], 256
    $region29: #{net_forward.1} parent=1 // pred_fallthru
      _
    // Predicated region
    $region30: #{net_forward.1} parent=1 // pred_check
      _
    $region31: #{net_forward.1} parent=1 // pred_check_branch
      %57 = sbr.rel (0) target = $region33
    $region32: #{net_forward.1} parent=1 // pred_region
      %58 = dma.done [#allocation5], 3200
    $region33: #{net_forward.1} parent=1 // pred_fallthru
      _
    // Predicated region
    $region34: #{net_forward.1} parent=1 // pred_check
      _
    $region35: #{net_forward.1} parent=1 // pred_check_branch
      %60 = sbr.rel (0) target = $region37
    $region36: #{net_forward.1} parent=1 // pred_region
      %61 = dma.done [#allocation5], 2048
    $region37: #{net_forward.1} parent=1 // pred_fallthru
      _
    %v62 = vld [vmem:[#allocation2] sm:$0xff]
    %v63 = vld [vmem:[#allocation2 + $0x8] sm:$0xff]
    %v64 = vld [vmem:[#allocation4] sm:$0xff]
    %v65 = vld [vmem:[#allocation4 + $0x8] sm:$0xff]
    %v66 = vld [vmem:[#allocation4 + $0x10] sm:$0xff]
    %v67 = vld [vmem:[#allocation4 + $0x18] sm:$0xff]
    %v68 = vld [vmem:[#allocation4 + $0x20] sm:$0xff]
    %v69 = vld [vmem:[#allocation4 + $0x28] sm:$0xff]
    %v70 = vld [vmem:[#allocation4 + $0x30] sm:$0xff]
    %v71 = vld [vmem:[#allocation4 + $0x38] sm:$0xff]
    %v72 = vld [vmem:[#allocation4 + $0x40] sm:$0xff]
    %v73 = vld [vmem:[#allocation4 + $0x48] sm:$0xff]
    %v74 = vld [vmem:[#allocation4 + $0x50] sm:$0xff]
    %v75 = vld [vmem:[#allocation4 + $0x58] sm:$0xff]
    %v76 = vld [vmem:[#allocation4 + $0x60] sm:$0xff]
    %v77 = vld [vmem:[#allocation4 + $0x68] sm:$0xff]
    %v78 = vld [vmem:[#allocation4 + $0x70] sm:$0xff]
    %v79 = vld [vmem:[#allocation4 + $0x78] sm:$0xff]
    %v80 = vld [vmem:[#allocation4 + $0x80] sm:$0xff]
    %v81 = vld [vmem:[#allocation4 + $0x88] sm:$0xff]
    %v82 = vld [vmem:[#allocation4 + $0x90] sm:$0xff]
    %v83 = vld [vmem:[#allocation4 + $0x98] sm:$0xff]
    %v84 = vld [vmem:[#allocation4 + $0xa0] sm:$0xff]
    %v85 = vld [vmem:[#allocation4 + $0xa8] sm:$0xff]
    %v86 = vld [vmem:[#allocation4 + $0xb0] sm:$0xff]
    %v87 = vld [vmem:[#allocation4 + $0xb8] sm:$0xff]
    %v88 = vld [vmem:[#allocation4 + $0xc0] sm:$0x3f]
    %v89 = vld [vmem:[%s2] sm:$0x1]
    %v91 = vlaneseq
    %v92 = vshrl.u32 %v91, 7
    %v93 = vsub.s32 0, %v92
    %v94 = vrot.slane %v89, %v93
    %vm96 = vcmask 572416
    %v98 = vsel %vm96, %v63, 0
    %vm100 = vcmask 1045504
    %v102 = vsel %vm100, %v88, 0
    %104 = vmatprep.subr.mxu0 0.0
    %105 = vmatpush1.msra.mxu0 %v79
    %106 = vmatprep.subr.mxu0 0.0
    %107 = vmatpush1.msra.mxu0 %v78
    %108 = vmatprep.subr.mxu0 0.0
    %109 = vmatpush1.msra.mxu0 %v77
    %110 = vmatprep.subr.mxu0 0.0
    %111 = vmatpush1.msra.mxu0 %v76
    %112 = vmatprep.subr.mxu0 0.0
    %113 = vmatpush1.msra.mxu0 %v75
    %114 = vmatprep.subr.mxu0 0.0
    %115 = vmatpush1.msra.mxu0 %v74
    %116 = vmatprep.subr.mxu0 0.0
    %117 = vmatpush1.msra.mxu0 %v73
    %118 = vmatprep.subr.mxu0 0.0
    %119 = vmatpush1.msra.mxu0 %v72
    %120 = vmatprep.subr.mxu0 0.0
    %121 = vmatpush1.msra.mxu0 %v71
    %122 = vmatprep.subr.mxu0 0.0
    %123 = vmatpush1.msra.mxu0 %v70
    %124 = vmatprep.subr.mxu0 0.0
    %125 = vmatpush1.msra.mxu0 %v69
    %126 = vmatprep.subr.mxu0 0.0
    %127 = vmatpush1.msra.mxu0 %v68
    %128 = vmatprep.subr.mxu0 0.0
    %129 = vmatpush1.msra.mxu0 %v67
    %130 = vmatprep.subr.mxu0 0.0
    %131 = vmatpush1.msra.mxu0 %v66
    %132 = vmatprep.subr.mxu0 0.0
    %133 = vmatpush1.msra.mxu0 %v65
    %134 = vmatprep.subr.mxu0 0.0
    %135 = vmatpush1.msra.mxu0 %v64
    %136 = vmatprep.subr.mxu0 0.0
    %137 = vmatpush2.msra.mxu0 0.0
    %138 = vmatprep.subr.mxu0 0.0
    %139 = vmatpush2.msra.mxu0 0.0
    %140 = vmatprep.subr.mxu0 0.0
    %141 = vmatpush2.msra.mxu0 0.0
    %142 = vmatprep.subr.mxu0 0.0
    %143 = vmatpush2.msra.mxu0 0.0
    %144 = vmatprep.subr.mxu0 0.0
    %145 = vmatpush2.msra.mxu0 0.0
    %146 = vmatprep.subr.mxu0 0.0
    %147 = vmatpush2.msra.mxu0 0.0
    %148 = vmatprep.subr.mxu0 0.0
    %149 = vmatpush2.msra.mxu0 0.0
    %150 = vmatprep.subr.mxu0 0.0
    %151 = vmatpush2.msra.mxu0 %v102
    %152 = vmatprep.subr.mxu0 0.0
    %153 = vmatpush2.msra.mxu0 %v87
    %154 = vmatprep.subr.mxu0 0.0
    %155 = vmatpush2.msra.mxu0 %v86
    %156 = vmatprep.subr.mxu0 0.0
    %157 = vmatpush2.msra.mxu0 %v85
    %158 = vmatprep.subr.mxu0 0.0
    %159 = vmatpush2.msra.mxu0 %v84
    %160 = vmatprep.subr.mxu0 0.0
    %161 = vmatpush2.msra.mxu0 %v83
    %162 = vmatprep.subr.mxu0 0.0
    %163 = vmatpush2.msra.mxu0 %v82
    %164 = vmatprep.subr.mxu0 0.0
    %165 = vmatpush2.msra.mxu0 %v81
    %166 = vmatprep.subr.mxu0 0.0
    %167 = vmatpush2.msra.mxu0 %v80
    %168 = vmatprep.mubr.f32.mxu0 %v98
    %169 = vmatmul.mubr.f32.gmra.mxu0 %v62
    %v170 = vpop.f32.mrf.mxu0
    %v171 = vadd.f32 %v94, %v170
    %v172 = vpop.f32.mrf.mxu0
    %173 = vdwg.mxu0
    %v174 = vmul.f32 %v171, 0.5
    %v175 = vtanh.pop %v174
    %v176 = vadd.f32 %v175, 1.0
    %v177 = vmul.f32 %v176, 0.5
    %v178 = vld [vmem:[#allocation6] sm:$0xff]
    %v179 = vld [vmem:[#allocation6 + $0x8] sm:$0xff]
    %v180 = vld [vmem:[#allocation6 + $0x10] sm:$0xff]
    %v181 = vld [vmem:[#allocation6 + $0x18] sm:$0xff]
    %v182 = vld [vmem:[#allocation6 + $0x20] sm:$0xff]
    %v183 = vld [vmem:[#allocation6 + $0x28] sm:$0xff]
    %v184 = vld [vmem:[#allocation6 + $0x30] sm:$0xff]
    %v185 = vld [vmem:[#allocation6 + $0x38] sm:$0xff]
    %v186 = vld [vmem:[#allocation6 + $0x40] sm:$0xff]
    %v187 = vld [vmem:[#allocation6 + $0x48] sm:$0xff]
    %v188 = vld [vmem:[#allocation6 + $0x50] sm:$0xff]
    %v189 = vld [vmem:[#allocation6 + $0x58] sm:$0xff]
    %v190 = vld [vmem:[#allocation6 + $0x60] sm:$0xff]
    %v191 = vld [vmem:[#allocation6 + $0x68] sm:$0xff]
    %v192 = vld [vmem:[#allocation6 + $0x70] sm:$0xff]
    %v193 = vld [vmem:[#allocation6 + $0x78] sm:$0xff]
    %v194 = vld [vmem:[%s4] sm:$0x1]
    %v196 = vlaneseq
    %v197 = vshrl.u32 %v196, 7
    %v198 = vsub.s32 0, %v197
    %v199 = vrot.slane %v194, %v198
    %201 = vmatprep.subr.mxu0 0.0
    %202 = vmatpush1.msra.mxu0 %v193
    %203 = vmatprep.subr.mxu0 0.0
    %204 = vmatpush1.msra.mxu0 %v192
    %205 = vmatprep.subr.mxu0 0.0
    %206 = vmatpush1.msra.mxu0 %v191
    %207 = vmatprep.subr.mxu0 0.0
    %208 = vmatpush1.msra.mxu0 %v190
    %209 = vmatprep.subr.mxu0 0.0
    %210 = vmatpush1.msra.mxu0 %v189
    %211 = vmatprep.subr.mxu0 0.0
    %212 = vmatpush1.msra.mxu0 %v188
    %213 = vmatprep.subr.mxu0 0.0
    %214 = vmatpush1.msra.mxu0 %v187
    %215 = vmatprep.subr.mxu0 0.0
    %216 = vmatpush1.msra.mxu0 %v186
    %217 = vmatprep.subr.mxu0 0.0
    %218 = vmatpush1.msra.mxu0 %v185
    %219 = vmatprep.subr.mxu0 0.0
    %220 = vmatpush1.msra.mxu0 %v184
    %221 = vmatprep.subr.mxu0 0.0
    %222 = vmatpush1.msra.mxu0 %v183
    %223 = vmatprep.subr.mxu0 0.0
    %224 = vmatpush1.msra.mxu0 %v182
    %225 = vmatprep.subr.mxu0 0.0
    %226 = vmatpush1.msra.mxu0 %v181
    %227 = vmatprep.subr.mxu0 0.0
    %228 = vmatpush1.msra.mxu0 %v180
    %229 = vmatprep.subr.mxu0 0.0
    %230 = vmatpush1.msra.mxu0 %v179
    %231 = vmatprep.subr.mxu0 0.0
    %232 = vmatpush1.msra.mxu0 %v178
    %233 = vmatprep.subr.mxu0 0.0
    %234 = vmatpush2.msra.mxu0 0.0
    %235 = vmatprep.subr.mxu0 0.0
    %236 = vmatpush2.msra.mxu0 0.0
    %237 = vmatprep.subr.mxu0 0.0
    %238 = vmatpush2.msra.mxu0 0.0
    %239 = vmatprep.subr.mxu0 0.0
    %240 = vmatpush2.msra.mxu0 0.0
    %241 = vmatprep.subr.mxu0 0.0
    %242 = vmatpush2.msra.mxu0 0.0
    %243 = vmatprep.subr.mxu0 0.0
    %244 = vmatpush2.msra.mxu0 0.0
    %245 = vmatprep.subr.mxu0 0.0
    %246 = vmatpush2.msra.mxu0 0.0
    %247 = vmatprep.subr.mxu0 0.0
    %248 = vmatpush2.msra.mxu0 0.0
    %249 = vmatprep.subr.mxu0 0.0
    %250 = vmatpush2.msra.mxu0 0.0
    %251 = vmatprep.subr.mxu0 0.0
    %252 = vmatpush2.msra.mxu0 0.0
    %253 = vmatprep.subr.mxu0 0.0
    %254 = vmatpush2.msra.mxu0 0.0
    %255 = vmatprep.subr.mxu0 0.0
    %256 = vmatpush2.msra.mxu0 0.0
    %257 = vmatprep.subr.mxu0 0.0
    %258 = vmatpush2.msra.mxu0 0.0
    %259 = vmatprep.subr.mxu0 0.0
    %260 = vmatpush2.msra.mxu0 0.0
    %261 = vmatprep.subr.mxu0 0.0
    %262 = vmatpush2.msra.mxu0 0.0
    %263 = vmatprep.subr.mxu0 0.0
    %264 = vmatpush2.msra.mxu0 0.0
    %265 = vmatprep.mubr.f32.mxu0 0.0
    %266 = vmatmul.mubr.f32.gmra.mxu0 %v177
    %v267 = vpop.f32.mrf.mxu0
    %v268 = vadd.f32 %v199, %v267
    %v269 = vpop.f32.mrf.mxu0
    %270 = vdwg.mxu0
    %v271 = vmul.f32 %v268, 0.5
    %v272 = vtanh.pop %v271
    %v273 = vadd.f32 %v272, 1.0
    %v274 = vmul.f32 %v273, 0.5
    %v275 = vld [vmem:[%s5] sm:$0x1]
    %v277 = vlaneseq
    %v278 = vshrl.u32 %v277, 7
    %v279 = vsub.s32 0, %v278
    %v280 = vrot.slane %v275, %v279
    %v282 = vmul.f32 %v274, %v280
    %283 = vadd.xlane.f32.xlu0 %v282
    %v284 = vpop.xlane.xlu0 %283
    %vm285 = vcmask 7168
    %286 = vst.msk [vmem:[%s6] sm:$0xff] %vm285, %v284
    // Predicated region
    $region38: #{net_forward.1} parent=1 // pred_check
      _
    $region39: #{net_forward.1} parent=1 // pred_check_branch
      %288 = sbr.rel (0) target = $region41
    $region40: #{net_forward.1} parent=1 // pred_region
      _
    $region41: #{net_forward.1} parent=1 // pred_fallthru
      _
    // Predicated region
    $region42: #{net_forward.1} parent=1 // pred_check
      _
    $region43: #{net_forward.1} parent=1 // pred_check_branch
      %290 = sbr.rel (0) target = $region45
    $region44: #{net_forward.1} parent=1 // pred_region
      _
    $region45: #{net_forward.1} parent=1 // pred_fallthru
      _
    %291 = vsyncpa [#allocation3], 1
    %292 = vsyncpa [#allocation5], 1

</llo_original>
